<compile_context>
chip_gen: v5e
topology: v5e:2x2
jax: 0.10.0
libtpu: 0.0.40
codegen_flags: <defaults>
</compile_context>

<pallas_src>
import jax
import jax.numpy as jnp
from jax.experimental import pallas as pl
from jax.experimental.pallas import tpu as pltpu


def _data_embedding_kernel(x_ref, w_ref, posb_ref, o_ref):
    # x_ref   : (TB, TL, D_in)      -- current (batch-tile, row-tile) block
    # w_ref   : (D_in, D_model)     -- resident value-embedding weight
    # posb_ref: (TL, D_model)       -- pos_table[row tile] + bias (pre-folded)
    # o_ref   : (TB, TL, D_model)
    TB, TL, D_in = x_ref.shape
    D_model = w_ref.shape[1]
    x2 = x_ref[...].reshape(TB * TL, D_in)                                 # merge leading dims
    val = jnp.dot(x2, w_ref[...], preferred_element_type=jnp.float32)     # MXU
    val = val.reshape(TB, TL, D_model) + posb_ref[...][None, :, :]        # VPU add
    o_ref[...] = val.astype(o_ref.dtype)                                  # lane-dense store


def _pick_row_tile(L, target):
    """Largest TL <= target with L % TL == 0 and TL % 8 == 0 (or full extent)."""
    if L <= target:
        return L
    for t in range(target, 7, -1):
        if L % t == 0 and t % 8 == 0:
            return t
    return L  # full-extent block is always a legal shape


def _pick_batch_tile(B, TL, D_in, D_model, out_itemsize,
                     target_step_bytes=4 << 20, vmem_budget=12 << 20):
    """Largest TB dividing B whose per-step output <= target and whose
    double-buffered working set stays under the (v5e-safe) VMEM budget."""
    d_in_pad = max(128, D_in)  # x block lane-pads D_in up to 128
    best = 1
    for tb in range(1, B + 1):
        if B % tb:
            continue
        working_set = (
            2 * (tb * TL * d_in_pad * 4          # x double-buffer (lane-padded)
                 + TL * D_model * 4              # pos+bias double-buffer
                 + tb * TL * D_model * out_itemsize)  # out double-buffer
            + D_in * D_model * 4                 # resident weight
        )
        if working_set > vmem_budget:
            continue
        if tb * TL * D_model * out_itemsize <= target_step_bytes:
            best = tb
    return best


def data_embedding(x, w, b, pos_table, *, out_dtype=None, row_tile_target=512):
    """
    x:         (B, L, D_in)                   float32
    w:         (D_in, D_model)                float32 (value_emb weight, transposed)
    b:         (D_model,)                     float32 (value_emb bias)
    pos_table: (seq_len+pred_len, D_model)    float32 (pos_emb weight)
    returns    (B, L, D_model) in `out_dtype` (default: x.dtype)
    """
    B, L, D_in = x.shape
    D_model = w.shape[1]
    out_dtype = x.dtype if out_dtype is None else out_dtype
    out_itemsize = jnp.dtype(out_dtype).itemsize
    assert L <= pos_table.shape[0], "sequence length exceeds positional table"

    # Host-side glue: pos = arange(L) -> first L rows of the table; fold in bias.
    pos_b = pos_table[:L, :] + b[None, :]      # (L, D_model)

    TL = _pick_row_tile(L, row_tile_target)
    TB = _pick_batch_tile(B, TL, D_in, D_model, out_itemsize)

    # v7x megacore: keep at least 2 parallel grid steps when possible.
    if (L // TL) * (B // TB) < 2 and B // TB == 1 and B >= 2:
        for tb in range(B // 2, 0, -1):
            if B % tb == 0:
                TB = tb
                break

    # Grid order: row-tiles OUTER, batch-tiles INNER -> pos_b block index is
    # constant across the inner sweep, so its DMA is skipped (read once total).
    grid = (L // TL, B // TB)

    grid_spec = pltpu.PrefetchScalarGridSpec(
        num_scalar_prefetch=0,
        grid=grid,
        in_specs=[
            pl.BlockSpec((TB, TL, D_in), lambda i, j: (j, i, 0)),     # x tile
            pl.BlockSpec((D_in, D_model), lambda i, j: (0, 0)),       # weight (resident)
            pl.BlockSpec((TL, D_model), lambda i, j: (i, 0)),         # pos+bias tile
        ],
        out_specs=pl.BlockSpec((TB, TL, D_model), lambda i, j: (j, i, 0)),
    )

    # Accurate DMA traffic: x once, weight once, pos+bias once, output once.
    cost = pl.CostEstimate(
        flops=2 * B * L * D_in * D_model,
        transcendentals=0,
        bytes_accessed=4 * (B * L * D_in + D_in * D_model + L * D_model)
        + out_itemsize * B * L * D_model,
    )

    return pl.pallas_call(
        _data_embedding_kernel,
        out_shape=jax.ShapeDtypeStruct((B, L, D_model), out_dtype),
        grid_spec=grid_spec,
        compiler_params=pltpu.CompilerParams(
            # No reduction axis: both grid dims independent -> parallel
            # (lets v7x shard steps across its 2 TensorCores).
            dimension_semantics=("parallel", "parallel"),
        ),
        cost_estimate=cost,
    )(x, w, pos_b)


def reference(x, w, b, pos_table):
    L = x.shape[1]
    return jnp.einsum("bld,dm->blm", x, w) + b[None, None, :] + pos_table[None, :L, :]


if __name__ == "__main__":
    # Small shapes consistent with the module's forward:
    #   batch=2, seq len L=8, input_dim=4, d_model=128 (lane-dense store),
    #   positional table size = seq_len + pred_len = 168 + 24 = 192 (module defaults).
    B, L, D_in, D_model = 2, 8, 4, 128
    MAX_POS = 168 + 24

    key = jax.random.PRNGKey(0)
    kx, kw, kb, kp = jax.random.split(key, 4)

    x = jax.random.normal(kx, (B, L, D_in), dtype=jnp.float32)
    # Deterministic synthetic parameters (shapes from nn.Linear / nn.Embedding).
    w = jax.random.normal(kw, (D_in, D_model), dtype=jnp.float32) * 0.1
    b = jax.random.normal(kb, (D_model,), dtype=jnp.float32) * 0.1
    pos_table = jax.random.normal(kp, (MAX_POS, D_model), dtype=jnp.float32) * 0.1

    out = jax.block_until_ready(data_embedding(x, w, b, pos_table))

    ref = reference(x, w, b, pos_table)
    assert out.shape == (B, L, D_model)
    assert jnp.allclose(out, ref, atol=1e-5, rtol=1e-5), "mismatch vs reference"

    print("KERNEL_OK")
</pallas_src>

<mosaic_0001>
module attributes {stable_mosaic.version = 11 : i64} {
  func.func @_data_embedding_kernel(%arg0: i32, %arg1: i32, %arg2: memref<1x8x4xf32, #tpu.memory_space<vmem>>, %arg3: memref<4x128xf32, #tpu.memory_space<vmem>>, %arg4: memref<8x128xf32, #tpu.memory_space<vmem>>, %arg5: memref<1x8x128xf32, #tpu.memory_space<vmem>>) attributes {dimension_semantics = [#tpu.dimension_semantics<parallel>, #tpu.dimension_semantics<parallel>], iteration_bounds = array<i64: 1, 2>, scalar_prefetch = 0 : i64, scratch_operands = 0 : i64, tpu.core_type = #tpu.core_type<tc>, window_params = [{transform_indices = @transform_0, window_bounds = array<i64: 1, 8, 4>}, {pipeline_mode = #tpu.pipeline_mode<synchronous>, transform_indices = @transform_1, window_bounds = array<i64: 4, 128>}, {transform_indices = @transform_2, window_bounds = array<i64: 8, 128>}, {transform_indices = @transform_3, window_bounds = array<i64: 1, 8, 128>}]} {
    %c0 = arith.constant 0 : index
    %c0_0 = arith.constant 0 : index
    %c0_1 = arith.constant 0 : index
    %0 = vector.load %arg2[%c0, %c0_0, %c0_1] : memref<1x8x4xf32, #tpu.memory_space<vmem>>, vector<1x8x4xf32>
    %1 = vector.shape_cast %0 : vector<1x8x4xf32> to vector<8x4xf32>
    %c0_2 = arith.constant 0 : index
    %c0_3 = arith.constant 0 : index
    %2 = vector.load %arg3[%c0_2, %c0_3] : memref<4x128xf32, #tpu.memory_space<vmem>>, vector<4x128xf32>
    %cst = arith.constant dense<0.000000e+00> : vector<8x128xf32>
    %3 = tpu.matmul %1, %2, %cst {dimension_numbers = #tpu.dot_dimension_numbers<[1], [0], [0], [1], [0, 0, 1, 1], [], []>} : vector<8x4xf32>, vector<4x128xf32>, vector<8x128xf32> -> vector<8x128xf32>
    %4 = vector.shape_cast %3 : vector<8x128xf32> to vector<1x8x128xf32>
    %c0_4 = arith.constant 0 : index
    %c0_5 = arith.constant 0 : index
    %5 = vector.load %arg4[%c0_4, %c0_5] : memref<8x128xf32, #tpu.memory_space<vmem>>, vector<8x128xf32>
    %6 = vector.shape_cast %5 : vector<8x128xf32> to vector<1x8x128xf32>
    %7 = arith.addf %4, %6 : vector<1x8x128xf32>
    %c0_6 = arith.constant 0 : index
    %c0_7 = arith.constant 0 : index
    %c0_8 = arith.constant 0 : index
    %8 = vector.load %arg5[%c0_6, %c0_7, %c0_8] : memref<1x8x128xf32, #tpu.memory_space<vmem>>, vector<1x8x128xf32>
    tpu.vector_store %arg5[%c0_6, %c0_7, %c0_8], %7 {strides = array<i32>} : memref<1x8x128xf32, #tpu.memory_space<vmem>>, vector<1x8x128xf32>,
    return
  }
  func.func @transform_0(%arg0: i32, %arg1: i32) -> (i32, i32, i32) {
    %c0_i32 = arith.constant 0 : i32
    %c0_i32_0 = arith.constant 0 : i32
    return %arg1, %arg0, %c0_i32 : i32, i32, i32
  }
  func.func @transform_1(%arg0: i32, %arg1: i32) -> (i32, i32) {
    %c0_i32 = arith.constant 0 : i32
    %c0_i32_0 = arith.constant 0 : i32
    %c0_i32_1 = arith.constant 0 : i32
    return %c0_i32, %c0_i32_0 : i32, i32
  }
  func.func @transform_2(%arg0: i32, %arg1: i32) -> (i32, i32) {
    %c0_i32 = arith.constant 0 : i32
    %c0_i32_0 = arith.constant 0 : i32
    return %arg0, %c0_i32 : i32, i32
  }
  func.func @transform_3(%arg0: i32, %arg1: i32) -> (i32, i32, i32) {
    %c0_i32 = arith.constant 0 : i32
    %c0_i32_0 = arith.constant 0 : i32
    return %arg1, %arg0, %c0_i32 : i32, i32, i32
  }
}

</mosaic_0001>

<llo_original>
// kernel: tpu_custom_call.1
$region0: #{tpu_custom_call.1}
  #allocation0 [shape = 'u32[]', space=smem, size = 0x4, offset = 0x4, fixed_abs, tag = 'smem constant byte address 0x4 - core index']
  #allocation1 [shape = 'u32[72,128]{1,0:T(1,128)}', space=vmem, size = 0x9000, scoped, tag = 'internal scratch']
  %s0 = inlined_call_operand.vmem [shape: f32[2,8,4], index: 0, kind: input, shape index: {}]
  %s1 = inlined_call_operand.vmem [shape: f32[4,128], index: 1, kind: input, shape index: {}]
  %s2 = inlined_call_operand.vmem [shape: f32[8,128], index: 2, kind: input, shape index: {}]
  %s3 = inlined_call_operand.hbm [shape: f32[2,8,128], index: 3, kind: output, shape index: {}]
  %s4 = sld [smem:[#allocation0]]
  $region45: #{tpu_custom_call.1} parent=0
    _
  %s6 = ssub.s32 1, %s4
  %s7 = scalar_select 0, %s6, %s4
  $region1: #{tpu_custom_call.1} parent=0
    #allocation2 [shape = 'u8[8192]{0}', space=vmem, size = 0x2000, scoped, tag = 'output window, operand 0']
    #allocation3 [shape = 's32[2]{0}', space=sflag, size = 0x8, scoped, tag = 'scoped memory for tpu_custom_call.1']
    %8 = vsyncpa [#allocation3], 0
    %s9 = scalar_lea.sflag [#allocation3], 1
    %10 = vsyncpa %s9, 0
    loop: start=0, step=1, limit=4
    $region2: #{tpu_custom_call.1} parent=1 // loop_pre_header
      _
    $region3: #{tpu_custom_call.1} parent=1 // loop_header
      %s12 = sphi 0, %s16
      %p13 = scmp.ge.s32.totalorder %s12, 4
      %s19 = sphi 0, %s31
      %s20 = sphi 0, %s27
      %s21 = sphi 0, %s19
      %s22 = sphi 0, %s20
      %s23 = sphi 0, %s21
      %s24 = sphi 0, %s22
      %s36 = sphi 0, %s38
      %s39 = sphi 0, %s36
      %s40 = sphi 0, %s39
      %s56 = sphi 0, %s40
      %s60 = sphi 0, %s60
      %s62 = sphi 0, %s60
      %s63 = sphi 0, %s62
      %s77 = sphi 0, %s63
      %s83 = sphi 0, %s85
      %s86 = sphi 0, %s83
      %s87 = sphi 0, %s86
      %s103 = sphi 0, %s87
      %s111 = sphi 0, %s113
      %s114 = sphi 0, %s111
      %s115 = sphi 0, %s114
      %s131 = sphi 0, %s115
    $region4: #{tpu_custom_call.1} parent=1 // loop_header_branch
      %15 = sbr.rel (%p13) target = $region8
    $region5: #{tpu_custom_call.1} parent=1 // loop_body
      %s17 = ssub.s32 %s12, 1
      %s18 = ssub.s32 %s12, 2
      %s25 = sadd.s32 1, %s20
      %p26 = scmp.ge.s32.totalorder %s25, 2
      %s27 = scalar_select %p26, 0, %s25
      %s28 = sadd.s32 1, %s19
      %s29 = scalar_select %p26, %s28, %s19
      %p30 = scmp.ge.s32.totalorder %s29, 1
      %s31 = scalar_select %p30, 0, %s29
      %s32 = ssub.s32 %s20, %s27
      %s33 = ssub.s32 %s19, %s31
      %s34 = sor.u32 %s32, %s33
      %p35 = scmp.eq.s32.totalorder %s34, 0
      %s37 = sadd.s32 %s36, 1
      %s38 = scalar_select %p35, %s36, %s37
      %p41 = pneg %p35
      %p42 = scmp.eq.s32.totalorder %s12, 1
      %p43 = por %p41, %p42
      %p44 = scmp.ne.s32.totalorder %s36, %s39
      %p45 = scmp.eq.s32.totalorder %s12, 0
      %p46 = por %p44, %p45
      %p47 = scmp.ne.s32.totalorder %s36, %s39
      %p48 = scmp.eq.s32.totalorder %s17, 1
      %p49 = por %p47, %p48
      %p50 = scmp.ne.s32.totalorder %s39, %s40
      %p51 = scmp.eq.s32.totalorder %s17, 0
      %p52 = por %p50, %p51
      %p53 = scmp.ne.s32.totalorder %s39, %s40
      %p54 = scmp.eq.s32.totalorder %s18, 1
      %p55 = por %p53, %p54
      %p57 = scmp.ne.s32.totalorder %s40, %s56
      %p58 = scmp.eq.s32.totalorder %s18, 0
      %p59 = por %p57, %p58
      %s61 = sadd.s32 %s60, 1
      %p64 = scmp.eq.s32.totalorder %s12, 1
      %p65 = scmp.ne.s32.totalorder %s60, %s62
      %p66 = scmp.eq.s32.totalorder %s12, 0
      %p67 = por %p65, %p66
      %p68 = scmp.ne.s32.totalorder %s60, %s62
      %p69 = scmp.eq.s32.totalorder %s17, 1
      %p70 = por %p68, %p69
      %p71 = scmp.ne.s32.totalorder %s62, %s63
      %p72 = scmp.eq.s32.totalorder %s17, 0
      %p73 = por %p71, %p72
      %p74 = scmp.ne.s32.totalorder %s62, %s63
      %p75 = scmp.eq.s32.totalorder %s18, 1
      %p76 = por %p74, %p75
      %p78 = scmp.ne.s32.totalorder %s63, %s77
      %p79 = scmp.eq.s32.totalorder %s18, 0
      %p80 = por %p78, %p79
      %s81 = ssub.s32 %s19, %s31
      %p82 = scmp.eq.s32.totalorder %s81, 0
      %s84 = sadd.s32 %s83, 1
      %s85 = scalar_select %p82, %s83, %s84
      %p88 = pneg %p82
      %p89 = scmp.eq.s32.totalorder %s12, 1
      %p90 = por %p88, %p89
      %p91 = scmp.ne.s32.totalorder %s83, %s86
      %p92 = scmp.eq.s32.totalorder %s12, 0
      %p93 = por %p91, %p92
      %p94 = scmp.ne.s32.totalorder %s83, %s86
      %p95 = scmp.eq.s32.totalorder %s17, 1
      %p96 = por %p94, %p95
      %p97 = scmp.ne.s32.totalorder %s86, %s87
      %p98 = scmp.eq.s32.totalorder %s17, 0
      %p99 = por %p97, %p98
      %p100 = scmp.ne.s32.totalorder %s86, %s87
      %p101 = scmp.eq.s32.totalorder %s18, 1
      %p102 = por %p100, %p101
      %p104 = scmp.ne.s32.totalorder %s87, %s103
      %p105 = scmp.eq.s32.totalorder %s18, 0
      %p106 = por %p104, %p105
      %s107 = ssub.s32 %s20, %s27
      %s108 = ssub.s32 %s19, %s31
      %s109 = sor.u32 %s107, %s108
      %p110 = scmp.eq.s32.totalorder %s109, 0
      %s112 = sadd.s32 %s111, 1
      %s113 = scalar_select %p110, %s111, %s112
      %p116 = pneg %p110
      %p117 = scmp.eq.s32.totalorder %s12, 1
      %p118 = por %p116, %p117
      %p119 = scmp.ne.s32.totalorder %s111, %s114
      %p120 = scmp.eq.s32.totalorder %s12, 0
      %p121 = por %p119, %p120
      %p122 = scmp.ne.s32.totalorder %s111, %s114
      %p123 = scmp.eq.s32.totalorder %s17, 1
      %p124 = por %p122, %p123
      %p125 = scmp.ne.s32.totalorder %s114, %s115
      %p126 = scmp.eq.s32.totalorder %s17, 0
      %p127 = por %p125, %p126
      %p128 = scmp.ne.s32.totalorder %s114, %s115
      %p129 = scmp.eq.s32.totalorder %s18, 1
      %p130 = por %p128, %p129
      %p132 = scmp.ne.s32.totalorder %s115, %s131
      %p133 = scmp.eq.s32.totalorder %s18, 0
      %p134 = por %p132, %p133
      %p135 = scmp.le.s32.totalorder 1, %s12
      %p136 = scmp.lt.s32.totalorder %s12, 3
      %p137 = pnand %p135, %p136
      %p138 = pneg %p137
      // Predicated region
      $region9: #{tpu_custom_call.1} parent=5 // pred_check
        _
      $region10: #{tpu_custom_call.1} parent=5 // pred_check_branch
        %140 = sbr.rel (%p137) target = $region12
      $region11: #{tpu_custom_call.1} parent=5 // pred_region
        %s141 = ssub.s32 %s12, 1
        // Predicated region
        $region13: #{tpu_custom_call.1} parent=11 // pred_check
          %p142 = pneg %p73
        $region14: #{tpu_custom_call.1} parent=11 // pred_check_branch
          %144 = sbr.rel (%p142) target = $region16
        $region15: #{tpu_custom_call.1} parent=11 // pred_region
          _
        $region16: #{tpu_custom_call.1} parent=11 // pred_fallthru
          _
        // Predicated region
        $region17: #{tpu_custom_call.1} parent=11 // pred_check
          %p145 = pneg %p99
        $region18: #{tpu_custom_call.1} parent=11 // pred_check_branch
          %147 = sbr.rel (%p145) target = $region20
        $region19: #{tpu_custom_call.1} parent=11 // pred_region
          %p148 = scmp.lt.s32.totalorder %s21, 0
          %s149 = scalar_select %p148, %s21, 0
          %s150 = smul.addr %s149, 8
          %s151 = scalar_lea.vmem %s2, %s150
        $region20: #{tpu_custom_call.1} parent=11 // pred_fallthru
          _
      $region12: #{tpu_custom_call.1} parent=5 // pred_fallthru
        _
      %p152 = scmp.lt.s32.totalorder %s12, 2
      // Predicated region
      $region21: #{tpu_custom_call.1} parent=5 // pred_check
        %p153 = pneg %p152
      $region22: #{tpu_custom_call.1} parent=5 // pred_check_branch
        %155 = sbr.rel (%p153) target = $region24
      $region23: #{tpu_custom_call.1} parent=5 // pred_region
        // Predicated region
        $region25: #{tpu_custom_call.1} parent=23 // pred_check
          %p156 = pneg %p46
        $region26: #{tpu_custom_call.1} parent=23 // pred_check_branch
          %158 = sbr.rel (%p156) target = $region28
        $region27: #{tpu_custom_call.1} parent=23 // pred_region
          %p159 = scmp.lt.s32.totalorder %s20, 1
          %s160 = scalar_select %p159, %s20, 1
          %p161 = scmp.lt.s32.totalorder %s19, 0
          %s162 = scalar_select %p161, %s19, 0
          %s163 = sadd.s32 %s162, %s160
          %s164 = smul.addr %s163, 8
          %s165 = scalar_lea.vmem %s0, %s164
        $region28: #{tpu_custom_call.1} parent=23 // pred_fallthru
          _
      $region24: #{tpu_custom_call.1} parent=5 // pred_fallthru
        _
      %p166 = scmp.le.s32.totalorder 1, %s12
      %p167 = scmp.lt.s32.totalorder %s12, 3
      %p168 = pnand %p166, %p167
      %p169 = pneg %p168
      // Predicated region
      $region29: #{tpu_custom_call.1} parent=5 // pred_check
        _
      $region30: #{tpu_custom_call.1} parent=5 // pred_check_branch
        %171 = sbr.rel (%p168) target = $region32
      $region31: #{tpu_custom_call.1} parent=5 // pred_region
        %s172 = ssub.s32 %s12, 1
        %p173 = scmp.lt.s32.totalorder %s22, 1
        %s174 = scalar_select %p173, %s22, 1
        %p175 = scmp.lt.s32.totalorder %s21, 0
        %s176 = scalar_select %p175, %s21, 0
        %s177 = sadd.s32 %s176, %s174
        %s178 = smul.addr %s177, 8
        %s179 = scalar_lea.vmem %s0, %s178
        %p180 = pneg %p52
        %p181 = pneg %p49
        %p182 = pneg %p73
        %p183 = pneg %p70
        %p184 = scmp.lt.s32.totalorder %s21, 0
        %s185 = scalar_select %p184, %s21, 0
        %s186 = smul.addr %s185, 8
        %s187 = scalar_lea.vmem %s2, %s186
        %p188 = pneg %p99
        %p189 = pneg %p96
        %p190 = pneg %p127
        %p191 = pneg %p124
        %s192 = sand.u32 %s114, 1
        %s193 = scalar_lea.sflag [#allocation3], %s192
        %s194 = sand.u32 %s114, 1
        %s195 = smul.addr %s194, 8
        %s196 = scalar_lea.vmem [#allocation2], %s195
        %p197 = scmp.lt.s32.totalorder %s22, 1
        %s198 = scalar_select %p197, %s22, 1
        %p199 = scmp.lt.s32.totalorder %s21, 0
        %s200 = scalar_select %p199, %s21, 0
        %s201 = sadd.s32 %s200, %s198
        %s202 = smul.addr %s201, 8
        %s203 = scalar_lea.vmem %s0, %s202
        %p204 = scmp.lt.s32.totalorder %s21, 0
        %s205 = scalar_select %p204, %s21, 0
        %s206 = smul.addr %s205, 8
        %s207 = scalar_lea.vmem %s2, %s206
        %v208 = vld [vmem:[%s203] sm:$0xff]
        %v209 = vld [vmem:[%s1] sm:$0xf]
        %vm210 = vcmask 31744
        %v212 = vsel %vm210, %v208, 0
        %vm214 = vcmask 1043456
        %v216 = vsel %vm214, %v209, 0
        %218 = vmatpush.msra.mxu0 0.0
        %219 = vmatpush.msra.mxu0 0.0
        %220 = vmatpush.msra.mxu0 0.0
        %221 = vmatpush.msra.mxu0 0.0
        %222 = vmatpush.msra.mxu0 0.0
        %223 = vmatpush.msra.mxu0 0.0
        %224 = vmatpush.msra.mxu0 0.0
        %225 = vmatpush.msra.mxu0 0.0
        %226 = vmatpush.msra.mxu0 0.0
        %227 = vmatpush.msra.mxu0 0.0
        %228 = vmatpush.msra.mxu0 0.0
        %229 = vmatpush.msra.mxu0 0.0
        %230 = vmatpush.msra.mxu0 0.0
        %231 = vmatpush.msra.mxu0 0.0
        %232 = vmatpush.msra.mxu0 0.0
        %233 = vmatpush.msra.mxu0 %v216
        %234 = vmatmul.f32.gmra.mxu0 %v212
        %v235 = vpop.f32.mrf.mxu0
        %v236 = vadd.f32 0.0, %v235
        %237 = vdwg.mxu0
        %v238 = vld [vmem:[%s207] sm:$0xff]
        %v239 = vadd.f32 %v236, %v238
        %240 = vst [vmem:[%s196] sm:$0xff] %v239
        %s241 = sand.u32 %s114, 1
        %s242 = scalar_lea.sflag [#allocation3], %s241
        %s243 = sand.u32 %s114, 1
        %s244 = smul.addr %s243, 8
        %s245 = scalar_lea.vmem [#allocation2], %s244
        // Predicated region
        $region33: #{tpu_custom_call.1} parent=31 // pred_check
          %p246 = pneg %p124
        $region34: #{tpu_custom_call.1} parent=31 // pred_check_branch
          %248 = sbr.rel (%p246) target = $region36
        $region35: #{tpu_custom_call.1} parent=31 // pred_region
          %250 = vsyncadd %s242, 0
          %s251 = sadd.s32 %s21, %s22
          %s252 = smul.addr %s251, 8
          %s253 = scalar_lea.hbm %s3, %s252
          %s255 = sshll.u32 %s245, 4
          %s256 = int_to_ptr.vmem [resolvable:$true] %s255
          %s257 = sshll.u32 %s253, 4
          %s258 = int_to_ptr.hbm [resolvable:$true] %s257
          %260 = dma.vmem_to_hbm [thread:$0]  %s256, 128, %s258, %s242
        $region36: #{tpu_custom_call.1} parent=31 // pred_fallthru
          _
      $region32: #{tpu_custom_call.1} parent=5 // pred_fallthru
        _
      %p261 = scmp.le.s32.totalorder 2, %s12
      // Predicated region
      $region37: #{tpu_custom_call.1} parent=5 // pred_check
        %p262 = pneg %p261
      $region38: #{tpu_custom_call.1} parent=5 // pred_check_branch
        %264 = sbr.rel (%p262) target = $region40
      $region39: #{tpu_custom_call.1} parent=5 // pred_region
        %s265 = ssub.s32 %s12, 2
        // Predicated region
        $region41: #{tpu_custom_call.1} parent=39 // pred_check
          %p266 = pneg %p130
        $region42: #{tpu_custom_call.1} parent=39 // pred_check_branch
          %268 = sbr.rel (%p266) target = $region44
        $region43: #{tpu_custom_call.1} parent=39 // pred_region
          %s269 = sand.u32 %s115, 1
          %s270 = scalar_lea.sflag [#allocation3], %s269
          %s271 = sand.u32 %s115, 1
          %s272 = smul.addr %s271, 8
          %s273 = scalar_lea.vmem [#allocation2], %s272
          %275 = dma.done %s270, 128
        $region44: #{tpu_custom_call.1} parent=39 // pred_fallthru
          _
      $region40: #{tpu_custom_call.1} parent=5 // pred_fallthru
        _
    $region6: #{tpu_custom_call.1} parent=1 // loop_footer
      %s16 = sadd.s32 1, %s12
    $region7: #{tpu_custom_call.1} parent=1 // loop_footer_branch
      %11 = sbr.rel target = $region3
    $region8: #{tpu_custom_call.1} parent=1 // loop_exit
      _
    %276 = vsyncpa [#allocation3], 1
    %s277 = scalar_lea.sflag [#allocation3], 1
    %278 = vsyncpa %s277, 1

</llo_original>
